<compile_context>
chip_gen: v7x
topology: tpu7x:2x2x1
jax: 0.10.0
libtpu: 0.0.40
codegen_flags: <defaults>
</compile_context>

<pallas_src>
import jax
import jax.numpy as jnp
from jax import lax
from jax.experimental import pallas as pl
from jax.experimental.pallas import tpu as pltpu


def _round_up(a, b):
    return -(-a // b) * b


def _attention_global_kernel(r_ref, wk_ref, bk_ref, w1_ref, b1_ref, w2_ref, b2_ref, o_ref):
    # r_ref : (36*Cin, L)   im2col patches; rows = (tap ky,kx, pool-slot py,px, ci),
    #                       lanes = output positions (n, ho, wo)
    # wk_ref: (4*Cout, 36*Cin)  conv weights (BN folded), rows = (pool-slot, cout)
    # bk_ref: (4*Cout, 1)       conv bias (BN folded), same row order
    # w1_ref: (MLP, Cout)   b1_ref: (MLP, 1)     attention MLP layer 1
    # w2_ref: (Cout, MLP)   b2_ref: (Cout, 1)    attention MLP layer 2
    # o_ref : (1, L)        attention-weighted channel sum per position
    cout = w2_ref.shape[0]

    # conv (+ folded BN) as a single MXU matmul, default precision, f32 accumulation
    z = jnp.dot(wk_ref[...], r_ref[...], preferred_element_type=jnp.float32)
    z = jnp.maximum(z + bk_ref[...], 0.0)                     # bias + ReLU, (4*Cout, L)

    # 2x2 max-pool == max over the 4 contiguous sublane groups (pool-slot major rows)
    v = jnp.maximum(
        jnp.maximum(z[0 * cout:1 * cout], z[1 * cout:2 * cout]),
        jnp.maximum(z[2 * cout:3 * cout], z[3 * cout:4 * cout]),
    )                                                         # (Cout, L)  == visual_features^T

    # attention MLP: channels on sublanes, positions on lanes
    h = jnp.dot(w1_ref[...], v, preferred_element_type=jnp.float32) + b1_ref[...]
    h = jnp.where(h > 0, h, 0.01 * h)                         # LeakyReLU(0.01)
    s = jnp.dot(w2_ref[...], h, preferred_element_type=jnp.float32) + b2_ref[...]

    # softmax over channels (sublane axis) + weighted channel sum
    m = jnp.max(s, axis=0, keepdims=True)
    e = jnp.exp(s - m)
    inv = pl.reciprocal(jnp.sum(e, axis=0, keepdims=True), approx=True)
    a = e * inv
    o_ref[...] = jnp.sum(a * v, axis=0, keepdims=True).astype(o_ref.dtype)


def attention_global_forward(x, conv_w, conv_b, bn_gamma, bn_beta, bn_mean, bn_var,
                             attn_w1, attn_b1, attn_w2, attn_b2, *, eps=1e-5):
    """x: (N, Cin, H, W).  Returns (N, (H//2)*(W//2)) — same as AttentionGlobal.forward."""
    N, Cin, H, W = x.shape
    Cout = conv_w.shape[0]
    Ho, Wo = H // 2, W // 2              # MaxPool2d(2,2) floor mode (odd rows/cols dropped)
    P = N * Ho * Wo

    f32 = jnp.float32

    # --- fold eval-mode BatchNorm2d into conv weight/bias (parameter-only math) -----
    scale = bn_gamma.astype(f32) / jnp.sqrt(bn_var.astype(f32) + eps)          # (Cout,)
    wf = conv_w.astype(f32) * scale[:, None, None, None]
    bf = (conv_b.astype(f32) - bn_mean.astype(f32)) * scale + bn_beta.astype(f32)

    # --- im2col with the 2x2 pool window folded into the row (sublane) axis ---------
    # R[((ky*3+kx)*4 + py*2+px)*Cin + ci, (n*Ho+ho)*Wo + wo] = xpad[n, ci, 2ho+py+ky, 2wo+px+kx]
    xp = jnp.pad(x.astype(f32), ((0, 0), (0, 0), (1, 1), (1, 1)))
    cols = []
    for ky in range(3):
        for kx in range(3):
            for py in range(2):
                for px in range(2):
                    sl = xp[:, :, py + ky: py + ky + 2 * Ho: 2,
                                  px + kx: px + kx + 2 * Wo: 2]      # (N, Cin, Ho, Wo)
                    cols.append(jnp.transpose(sl, (1, 0, 2, 3)))     # (Cin, N, Ho, Wo)
    R = jnp.stack(cols, axis=0).reshape(36 * Cin, P)

    # --- conv weights expanded so rows = (pool-slot, cout), cols match R's rows -----
    wk_base = jnp.transpose(wf, (0, 2, 3, 1)).reshape(Cout, 9, Cin)   # [co, tap, ci]
    eye4 = jnp.eye(4, dtype=f32)
    wk2 = jnp.einsum('ckj,pq->pckqj', wk_base, eye4).reshape(4 * Cout, 36 * Cin)
    bk2 = jnp.tile(bf, 4).reshape(4 * Cout, 1)

    w1 = attn_w1.astype(f32)                       # (MLP, Cout)
    b1 = attn_b1.astype(f32).reshape(-1, 1)        # (MLP, 1)
    w2 = attn_w2.astype(f32)                       # (Cout, MLP)
    b2 = attn_b2.astype(f32).reshape(-1, 1)        # (Cout, 1)
    MLP = w1.shape[0]

    # --- tile the position (lane) axis across the grid ------------------------------
    LBLK = min(512, _round_up(P, 128))
    P_pad = _round_up(P, LBLK)
    if P_pad != P:
        R = jnp.pad(R, ((0, 0), (0, P_pad - P)))

    out = pl.pallas_call(
        _attention_global_kernel,
        out_shape=jax.ShapeDtypeStruct((1, P_pad), f32),
        grid_spec=pltpu.PrefetchScalarGridSpec(
            num_scalar_prefetch=0,
            grid=(P_pad // LBLK,),
            in_specs=[
                pl.BlockSpec((36 * Cin, LBLK), lambda i: (0, i)),
                pl.BlockSpec((4 * Cout, 36 * Cin), lambda i: (0, 0)),
                pl.BlockSpec((4 * Cout, 1), lambda i: (0, 0)),
                pl.BlockSpec((MLP, Cout), lambda i: (0, 0)),
                pl.BlockSpec((MLP, 1), lambda i: (0, 0)),
                pl.BlockSpec((Cout, MLP), lambda i: (0, 0)),
                pl.BlockSpec((Cout, 1), lambda i: (0, 0)),
            ],
            out_specs=pl.BlockSpec((1, LBLK), lambda i: (0, i)),
        ),
        compiler_params=pltpu.CompilerParams(
            dimension_semantics=("parallel",),
        ),
    )(R, wk2, bk2, w1, b1, w2, b2)

    return out[0, :P].reshape(N, Ho * Wo)


def _reference(x, conv_w, conv_b, bn_gamma, bn_beta, bn_mean, bn_var,
               attn_w1, attn_b1, attn_w2, attn_b2, eps=1e-5):
    """Pure-JAX reference of AttentionGlobal.forward (eval-mode BN)."""
    f32 = jnp.float32
    x = x.astype(f32)
    y = lax.conv_general_dilated(
        x, conv_w.astype(f32), (1, 1), ((1, 1), (1, 1)),
        dimension_numbers=("NCHW", "OIHW", "NCHW"),
    ) + conv_b.reshape(1, -1, 1, 1)
    y = (y - bn_mean.reshape(1, -1, 1, 1)) / jnp.sqrt(bn_var.reshape(1, -1, 1, 1) + eps)
    y = y * bn_gamma.reshape(1, -1, 1, 1) + bn_beta.reshape(1, -1, 1, 1)
    y = jnp.maximum(y, 0.0)                                                  # ReLU
    y = lax.reduce_window(y, -jnp.inf, lax.max, (1, 1, 2, 2), (1, 1, 2, 2), "VALID")
    N, C = y.shape[0], y.shape[1]
    v = jnp.transpose(y, (0, 2, 3, 1)).reshape(N, -1, C)                     # (N, Ho*Wo, C)
    h = v @ attn_w1.T + attn_b1
    h = jnp.where(h > 0, h, 0.01 * h)                                        # LeakyReLU(0.01)
    s = h @ attn_w2.T + attn_b2
    a = jax.nn.softmax(s, axis=2)
    return jnp.sum(a * v, axis=-1)                                           # (N, Ho*Wo)


if __name__ == "__main__":
    key = jax.random.PRNGKey(0)
    ks = jax.random.split(key, 11)

    # AttentionGlobal defaults: in_channels=4, channels_cnn=4, num_layers=1,
    # margin_in=16, non_lin_cnn='relu', batch_norm_cnn=True (eval mode), mlp_dim=32
    N, Cin, H, W = 2, 4, 16, 16
    Cout, MLP = 4, 32

    x = jax.random.normal(ks[0], (N, Cin, H, W), jnp.float32)
    conv_w = 0.2 * jax.random.normal(ks[1], (Cout, Cin, 3, 3), jnp.float32)
    conv_b = 0.1 * jax.random.normal(ks[2], (Cout,), jnp.float32)
    bn_gamma = 1.0 + 0.1 * jax.random.normal(ks[3], (Cout,), jnp.float32)
    bn_beta = 0.1 * jax.random.normal(ks[4], (Cout,), jnp.float32)
    bn_mean = 0.1 * jax.random.normal(ks[5], (Cout,), jnp.float32)
    bn_var = jnp.abs(1.0 + 0.1 * jax.random.normal(ks[6], (Cout,), jnp.float32))
    attn_w1 = 0.3 * jax.random.normal(ks[7], (MLP, Cout), jnp.float32)
    attn_b1 = 0.1 * jax.random.normal(ks[8], (MLP,), jnp.float32)
    attn_w2 = 0.3 * jax.random.normal(ks[9], (Cout, MLP), jnp.float32)
    attn_b2 = 0.1 * jax.random.normal(ks[10], (Cout,), jnp.float32)

    args = (x, conv_w, conv_b, bn_gamma, bn_beta, bn_mean, bn_var,
            attn_w1, attn_b1, attn_w2, attn_b2)

    out = jax.block_until_ready(attention_global_forward(*args))
    ref = jax.block_until_ready(_reference(*args))

    assert out.shape == (N, (H // 2) * (W // 2)), out.shape
    assert jnp.allclose(out, ref, atol=1e-2, rtol=1e-2), float(jnp.max(jnp.abs(out - ref)))

    print("KERNEL_OK")
</pallas_src>

<mosaic_0001>
module attributes {stable_mosaic.version = 11 : i64} {
  func.func @_attention_global_kernel(%arg0: i32, %arg1: memref<144x128xf32, #tpu.memory_space<vmem>>, %arg2: memref<16x144xf32, #tpu.memory_space<vmem>>, %arg3: memref<16x1xf32, #tpu.memory_space<vmem>>, %arg4: memref<32x4xf32, #tpu.memory_space<vmem>>, %arg5: memref<32x1xf32, #tpu.memory_space<vmem>>, %arg6: memref<4x32xf32, #tpu.memory_space<vmem>>, %arg7: memref<4x1xf32, #tpu.memory_space<vmem>>, %arg8: memref<1x128xf32, #tpu.memory_space<vmem>>) attributes {dimension_semantics = [#tpu.dimension_semantics<parallel>], iteration_bounds = array<i64: 1>, scalar_prefetch = 0 : i64, scratch_operands = 0 : i64, tpu.core_type = #tpu.core_type<tc>, window_params = [{transform_indices = @transform_0, window_bounds = array<i64: 144, 128>}, {pipeline_mode = #tpu.pipeline_mode<synchronous>, transform_indices = @transform_1, window_bounds = array<i64: 16, 144>}, {pipeline_mode = #tpu.pipeline_mode<synchronous>, transform_indices = @transform_2, window_bounds = array<i64: 16, 1>}, {pipeline_mode = #tpu.pipeline_mode<synchronous>, transform_indices = @transform_3, window_bounds = array<i64: 32, 4>}, {pipeline_mode = #tpu.pipeline_mode<synchronous>, transform_indices = @transform_4, window_bounds = array<i64: 32, 1>}, {pipeline_mode = #tpu.pipeline_mode<synchronous>, transform_indices = @transform_5, window_bounds = array<i64: 4, 32>}, {pipeline_mode = #tpu.pipeline_mode<synchronous>, transform_indices = @transform_6, window_bounds = array<i64: 4, 1>}, {transform_indices = @transform_7, window_bounds = array<i64: 1, 128>}]} {
    %c0 = arith.constant 0 : index
    %c0_0 = arith.constant 0 : index
    %0 = vector.load %arg2[%c0, %c0_0] : memref<16x144xf32, #tpu.memory_space<vmem>>, vector<16x144xf32>
    %c0_1 = arith.constant 0 : index
    %c0_2 = arith.constant 0 : index
    %1 = vector.load %arg1[%c0_1, %c0_2] : memref<144x128xf32, #tpu.memory_space<vmem>>, vector<144x128xf32>
    %cst = arith.constant dense<0.000000e+00> : vector<16x128xf32>
    %2 = tpu.matmul %0, %1, %cst {dimension_numbers = #tpu.dot_dimension_numbers<[1], [0], [0], [1], [0, 0, 1, 1], [], []>} : vector<16x144xf32>, vector<144x128xf32>, vector<16x128xf32> -> vector<16x128xf32>
    %c0_3 = arith.constant 0 : index
    %c0_4 = arith.constant 0 : index
    %3 = vector.load %arg3[%c0_3, %c0_4] : memref<16x1xf32, #tpu.memory_space<vmem>>, vector<16x1xf32>
    %4 = vector.broadcast %3 : vector<16x1xf32> to vector<16x128xf32>
    %5 = arith.addf %2, %4 : vector<16x128xf32>
    %cst_5 = arith.constant 0.000000e+00 : f32
    %6 = vector.broadcast %cst_5 : f32 to vector<16x128xf32>
    %7 = arith.maximumf %5, %6 : vector<16x128xf32>
    %8 = vector.extract_strided_slice %7 {offsets = [0, 0], sizes = [4, 128], strides = [1, 1]} : vector<16x128xf32> to vector<4x128xf32>
    %9 = vector.extract_strided_slice %7 {offsets = [4, 0], sizes = [4, 128], strides = [1, 1]} : vector<16x128xf32> to vector<4x128xf32>
    %10 = arith.maximumf %8, %9 : vector<4x128xf32>
    %11 = vector.extract_strided_slice %7 {offsets = [8, 0], sizes = [4, 128], strides = [1, 1]} : vector<16x128xf32> to vector<4x128xf32>
    %12 = vector.extract_strided_slice %7 {offsets = [12, 0], sizes = [4, 128], strides = [1, 1]} : vector<16x128xf32> to vector<4x128xf32>
    %13 = arith.maximumf %11, %12 : vector<4x128xf32>
    %14 = arith.maximumf %10, %13 : vector<4x128xf32>
    %c0_6 = arith.constant 0 : index
    %c0_7 = arith.constant 0 : index
    %15 = vector.load %arg4[%c0_6, %c0_7] : memref<32x4xf32, #tpu.memory_space<vmem>>, vector<32x4xf32>
    %cst_8 = arith.constant dense<0.000000e+00> : vector<32x128xf32>
    %16 = tpu.matmul %15, %14, %cst_8 {dimension_numbers = #tpu.dot_dimension_numbers<[1], [0], [0], [1], [0, 0, 1, 1], [], []>} : vector<32x4xf32>, vector<4x128xf32>, vector<32x128xf32> -> vector<32x128xf32>
    %c0_9 = arith.constant 0 : index
    %c0_10 = arith.constant 0 : index
    %17 = vector.load %arg5[%c0_9, %c0_10] : memref<32x1xf32, #tpu.memory_space<vmem>>, vector<32x1xf32>
    %18 = vector.broadcast %17 : vector<32x1xf32> to vector<32x128xf32>
    %19 = arith.addf %16, %18 : vector<32x128xf32>
    %cst_11 = arith.constant 0.000000e+00 : f32
    %20 = vector.broadcast %cst_11 : f32 to vector<32x128xf32>
    %21 = arith.cmpf ogt, %19, %20 : vector<32x128xf32>
    %cst_12 = arith.constant 0.00999999977 : f32
    %22 = vector.broadcast %cst_12 : f32 to vector<32x128xf32>
    %23 = arith.mulf %22, %19 : vector<32x128xf32>
    %24 = arith.select %21, %19, %23 : vector<32x128xi1>, vector<32x128xf32>
    %c0_13 = arith.constant 0 : index
    %c0_14 = arith.constant 0 : index
    %25 = vector.load %arg6[%c0_13, %c0_14] : memref<4x32xf32, #tpu.memory_space<vmem>>, vector<4x32xf32>
    %cst_15 = arith.constant dense<0.000000e+00> : vector<4x128xf32>
    %26 = tpu.matmul %25, %24, %cst_15 {dimension_numbers = #tpu.dot_dimension_numbers<[1], [0], [0], [1], [0, 0, 1, 1], [], []>} : vector<4x32xf32>, vector<32x128xf32>, vector<4x128xf32> -> vector<4x128xf32>
    %c0_16 = arith.constant 0 : index
    %c0_17 = arith.constant 0 : index
    %27 = vector.load %arg7[%c0_16, %c0_17] : memref<4x1xf32, #tpu.memory_space<vmem>>, vector<4x1xf32>
    %28 = vector.broadcast %27 : vector<4x1xf32> to vector<4x128xf32>
    %29 = arith.addf %26, %28 : vector<4x128xf32>
    %cst_18 = arith.constant dense<0xFF800000> : vector<128xf32>
    %30 = vector.multi_reduction <maximumf>, %29, %cst_18 [0] : vector<4x128xf32> to vector<128xf32>
    %31 = vector.shape_cast %30 : vector<128xf32> to vector<1x128xf32>
    %32 = vector.broadcast %31 : vector<1x128xf32> to vector<4x128xf32>
    %33 = arith.subf %29, %32 : vector<4x128xf32>
    %34 = math.exp %33 : vector<4x128xf32>
    %cst_19 = arith.constant dense<0.000000e+00> : vector<128xf32>
    %35 = vector.multi_reduction <add>, %34, %cst_19 [0] : vector<4x128xf32> to vector<128xf32>
    %36 = vector.shape_cast %35 : vector<128xf32> to vector<1x128xf32>
    %37 = tpu.reciprocal %36 {approx = true} : vector<1x128xf32> -> vector<1x128xf32>
    %38 = vector.broadcast %37 : vector<1x128xf32> to vector<4x128xf32>
    %39 = arith.mulf %34, %38 : vector<4x128xf32>
    %40 = arith.mulf %39, %14 : vector<4x128xf32>
    %cst_20 = arith.constant dense<0.000000e+00> : vector<128xf32>
    %41 = vector.multi_reduction <add>, %40, %cst_20 [0] : vector<4x128xf32> to vector<128xf32>
    %42 = vector.shape_cast %41 : vector<128xf32> to vector<1x128xf32>
    %c0_21 = arith.constant 0 : index
    %c0_22 = arith.constant 0 : index
    %43 = vector.load %arg8[%c0_21, %c0_22] : memref<1x128xf32, #tpu.memory_space<vmem>>, vector<1x128xf32>
    tpu.vector_store %arg8[%c0_21, %c0_22], %42 {strides = array<i32>} : memref<1x128xf32, #tpu.memory_space<vmem>>, vector<1x128xf32>,
    return
  }
  func.func @transform_0(%arg0: i32) -> (i32, i32) {
    %c0_i32 = arith.constant 0 : i32
    %c0_i32_0 = arith.constant 0 : i32
    return %c0_i32, %arg0 : i32, i32
  }
  func.func @transform_1(%arg0: i32) -> (i32, i32) {
    %c0_i32 = arith.constant 0 : i32
    %c0_i32_0 = arith.constant 0 : i32
    %c0_i32_1 = arith.constant 0 : i32
    return %c0_i32, %c0_i32_0 : i32, i32
  }
  func.func @transform_2(%arg0: i32) -> (i32, i32) {
    %c0_i32 = arith.constant 0 : i32
    %c0_i32_0 = arith.constant 0 : i32
    %c0_i32_1 = arith.constant 0 : i32
    return %c0_i32, %c0_i32_0 : i32, i32
  }
  func.func @transform_3(%arg0: i32) -> (i32, i32) {
    %c0_i32 = arith.constant 0 : i32
    %c0_i32_0 = arith.constant 0 : i32
    %c0_i32_1 = arith.constant 0 : i32
    return %c0_i32, %c0_i32_0 : i32, i32
  }
  func.func @transform_4(%arg0: i32) -> (i32, i32) {
    %c0_i32 = arith.constant 0 : i32
    %c0_i32_0 = arith.constant 0 : i32
    %c0_i32_1 = arith.constant 0 : i32
    return %c0_i32, %c0_i32_0 : i32, i32
  }
  func.func @transform_5(%arg0: i32) -> (i32, i32) {
    %c0_i32 = arith.constant 0 : i32
    %c0_i32_0 = arith.constant 0 : i32
    %c0_i32_1 = arith.constant 0 : i32
    return %c0_i32, %c0_i32_0 : i32, i32
  }
  func.func @transform_6(%arg0: i32) -> (i32, i32) {
    %c0_i32 = arith.constant 0 : i32
    %c0_i32_0 = arith.constant 0 : i32
    %c0_i32_1 = arith.constant 0 : i32
    return %c0_i32, %c0_i32_0 : i32, i32
  }
  func.func @transform_7(%arg0: i32) -> (i32, i32) {
    %c0_i32 = arith.constant 0 : i32
    %c0_i32_0 = arith.constant 0 : i32
    return %c0_i32, %arg0 : i32, i32
  }
}

</mosaic_0001>

<llo_original>
// kernel: tpu_custom_call.1
$region0: #{tpu_custom_call.1}
  #allocation0 [shape = 'u32[]', space=smem, size = 0x4, offset = 0x4, fixed_abs, tag = 'smem constant byte address 0x4 - core index']
  #allocation1 [shape = 'u32[144,128]{1,0:T(1,128)}', space=vmem, size = 0x12000, scoped, tag = 'internal scratch']
  %s0 = inlined_call_operand.hbm [shape: f32[144,128], index: 0, kind: input, shape index: {}]
  %s1 = inlined_call_operand.vmem [shape: f32[16,144], index: 1, kind: input, shape index: {}]
  %s2 = inlined_call_operand.vmem [shape: f32[16,1], index: 2, kind: input, shape index: {}]
  %s3 = inlined_call_operand.vmem [shape: f32[32,4], index: 3, kind: input, shape index: {}]
  %s4 = inlined_call_operand.vmem [shape: f32[32,1], index: 4, kind: input, shape index: {}]
  %s5 = inlined_call_operand.vmem [shape: f32[4,32], index: 5, kind: input, shape index: {}]
  %s6 = inlined_call_operand.vmem [shape: f32[4,1], index: 6, kind: input, shape index: {}]
  %s7 = inlined_call_operand.hbm [shape: f32[1,128], index: 7, kind: output, shape index: {}]
  %s8 = sld [smem:[#allocation0]]
  $region42: #{tpu_custom_call.1} parent=0
    _
  %s10 = ssub.s32 1, %s8
  %s11 = scalar_select 0, %s10, %s8
  $region1: #{tpu_custom_call.1} parent=0
    #allocation2 [shape = 'u8[73728]{0}', space=vmem, size = 0x12000, scoped, tag = 'input window, operand 0, single buffered']
    #allocation3 [shape = 's32[1]{0}', space=sflag, size = 0x4, scoped, tag = 'scoped memory for tpu_custom_call.1']
    #allocation4 [shape = 's32[1]{0}', space=sflag, size = 0x4, scoped, tag = 'scoped memory for tpu_custom_call.1']
    #allocation5 [shape = 'u8[512]{0}', space=vmem, size = 0x400, scoped, tag = 'output window, operand 0, single buffered']
    %12 = vsyncpa [#allocation3], 0
    %13 = vsyncpa [#allocation4], 0
    // Predicated region
    $region2: #{tpu_custom_call.1} parent=1 // pred_check
      _
    $region3: #{tpu_custom_call.1} parent=1 // pred_check_branch
      %15 = sbr.rel (0) target = $region5
    $region4: #{tpu_custom_call.1} parent=1 // pred_region
      %s17 = ssub.s32 2304, 2304
      %18 = vsyncadd [#allocation3], %s17
      %s19 = sshll.u32 [#allocation2], 4
      %s20 = int_to_ptr.vmem [resolvable:$true] %s19
      %25 = dma.hbm_to_vmem [thread:$0]  %s0, 2304, %s20, [#allocation3], 128, 128, 8
    $region5: #{tpu_custom_call.1} parent=1 // pred_fallthru
      _
    // Predicated region
    $region6: #{tpu_custom_call.1} parent=1 // pred_check
      _
    $region7: #{tpu_custom_call.1} parent=1 // pred_check_branch
      %27 = sbr.rel (0) target = $region9
    $region8: #{tpu_custom_call.1} parent=1 // pred_region
      _
    $region9: #{tpu_custom_call.1} parent=1 // pred_fallthru
      _
    // Predicated region
    $region10: #{tpu_custom_call.1} parent=1 // pred_check
      _
    $region11: #{tpu_custom_call.1} parent=1 // pred_check_branch
      %29 = sbr.rel (0) target = $region13
    $region12: #{tpu_custom_call.1} parent=1 // pred_region
      _
    $region13: #{tpu_custom_call.1} parent=1 // pred_fallthru
      _
    // Predicated region
    $region14: #{tpu_custom_call.1} parent=1 // pred_check
      _
    $region15: #{tpu_custom_call.1} parent=1 // pred_check_branch
      %31 = sbr.rel (0) target = $region17
    $region16: #{tpu_custom_call.1} parent=1 // pred_region
      _
    $region17: #{tpu_custom_call.1} parent=1 // pred_fallthru
      _
    // Predicated region
    $region18: #{tpu_custom_call.1} parent=1 // pred_check
      _
    $region19: #{tpu_custom_call.1} parent=1 // pred_check_branch
      %33 = sbr.rel (0) target = $region21
    $region20: #{tpu_custom_call.1} parent=1 // pred_region
      _
    $region21: #{tpu_custom_call.1} parent=1 // pred_fallthru
      _
    // Predicated region
    $region22: #{tpu_custom_call.1} parent=1 // pred_check
      _
    $region23: #{tpu_custom_call.1} parent=1 // pred_check_branch
      %35 = sbr.rel (0) target = $region25
    $region24: #{tpu_custom_call.1} parent=1 // pred_region
      _
    $region25: #{tpu_custom_call.1} parent=1 // pred_fallthru
      _
    // Predicated region
    $region26: #{tpu_custom_call.1} parent=1 // pred_check
      _
    $region27: #{tpu_custom_call.1} parent=1 // pred_check_branch
      %37 = sbr.rel (0) target = $region29
    $region28: #{tpu_custom_call.1} parent=1 // pred_region
      _
    $region29: #{tpu_custom_call.1} parent=1 // pred_fallthru
      _
    // Predicated region
    $region30: #{tpu_custom_call.1} parent=1 // pred_check
      _
    $region31: #{tpu_custom_call.1} parent=1 // pred_check_branch
      %39 = sbr.rel (0) target = $region33
    $region32: #{tpu_custom_call.1} parent=1 // pred_region
      %40 = dma.done [#allocation3], 2304
    $region33: #{tpu_custom_call.1} parent=1 // pred_fallthru
      _
    %v41 = vld [vmem:[%s1] sm:$0xff]
    %v42 = vld [vmem:[%s1 + $0x8] sm:$0xff]
    %v43 = vld [vmem:[%s1 + $0x10] sm:$0xff]
    %v44 = vld [vmem:[%s1 + $0x18] sm:$0xff]
    %v45 = vld [vmem:[#allocation2] sm:$0xff]
    %v46 = vld [vmem:[#allocation2 + $0x8] sm:$0xff]
    %v47 = vld [vmem:[#allocation2 + $0x10] sm:$0xff]
    %v48 = vld [vmem:[#allocation2 + $0x18] sm:$0xff]
    %v49 = vld [vmem:[#allocation2 + $0x20] sm:$0xff]
    %v50 = vld [vmem:[#allocation2 + $0x28] sm:$0xff]
    %v51 = vld [vmem:[#allocation2 + $0x30] sm:$0xff]
    %v52 = vld [vmem:[#allocation2 + $0x38] sm:$0xff]
    %v53 = vld [vmem:[#allocation2 + $0x40] sm:$0xff]
    %v54 = vld [vmem:[#allocation2 + $0x48] sm:$0xff]
    %v55 = vld [vmem:[#allocation2 + $0x50] sm:$0xff]
    %v56 = vld [vmem:[#allocation2 + $0x58] sm:$0xff]
    %v57 = vld [vmem:[#allocation2 + $0x60] sm:$0xff]
    %v58 = vld [vmem:[#allocation2 + $0x68] sm:$0xff]
    %v59 = vld [vmem:[#allocation2 + $0x70] sm:$0xff]
    %v60 = vld [vmem:[#allocation2 + $0x78] sm:$0xff]
    %v61 = vld [vmem:[#allocation2 + $0x80] sm:$0xff]
    %v62 = vld [vmem:[#allocation2 + $0x88] sm:$0xff]
    %v63 = vld [vmem:[%s2] sm:$0xff]
    %v64 = vld [vmem:[%s2 + $0x8] sm:$0xff]
    %66 = vset.pattern.permute.xlu0 0
    %67 = vperm.xlu0 %66, %v63
    %v68 = vpop.permute.xlu0 %67
    %71 = vset.pattern.permute.xlu0 0
    %72 = vperm.xlu0 %71, %v64
    %v73 = vpop.permute.xlu0 %72
    %vm75 = vcmask 130048
    %v77 = vsel %vm75, %v42, 0
    %v80 = vsel %vm75, %v44, 0
    %82 = vmatprep.subr.mxu0 0.0
    %83 = vmatpush1.msra.mxu0 %v45
    %84 = vmatprep.subr.mxu0 0.0
    %85 = vmatpush1.msra.mxu0 %v46
    %86 = vmatprep.subr.mxu0 0.0
    %87 = vmatpush1.msra.mxu0 %v47
    %88 = vmatprep.subr.mxu0 0.0
    %89 = vmatpush1.msra.mxu0 %v48
    %90 = vmatprep.subr.mxu0 0.0
    %91 = vmatpush1.msra.mxu0 %v49
    %92 = vmatprep.subr.mxu0 0.0
    %93 = vmatpush1.msra.mxu0 %v50
    %94 = vmatprep.subr.mxu0 0.0
    %95 = vmatpush1.msra.mxu0 %v51
    %96 = vmatprep.subr.mxu0 0.0
    %97 = vmatpush1.msra.mxu0 %v52
    %98 = vmatprep.subr.mxu0 0.0
    %99 = vmatpush1.msra.mxu0 %v53
    %100 = vmatprep.subr.mxu0 0.0
    %101 = vmatpush1.msra.mxu0 %v54
    %102 = vmatprep.subr.mxu0 0.0
    %103 = vmatpush1.msra.mxu0 %v55
    %104 = vmatprep.subr.mxu0 0.0
    %105 = vmatpush1.msra.mxu0 %v56
    %106 = vmatprep.subr.mxu0 0.0
    %107 = vmatpush1.msra.mxu0 %v57
    %108 = vmatprep.subr.mxu0 0.0
    %109 = vmatpush1.msra.mxu0 %v58
    %110 = vmatprep.subr.mxu0 0.0
    %111 = vmatpush1.msra.mxu0 %v59
    %112 = vmatprep.subr.mxu0 0.0
    %113 = vmatpush1.msra.mxu0 %v60
    %114 = vmatprep.subr.mxu0 0.0
    %115 = vmatpush1.msra.mxu0 %v61
    %116 = vmatprep.subr.mxu0 0.0
    %117 = vmatpush1.msra.mxu0 %v62
    %118 = vmatprep.subr.mxu0 0.0
    %119 = vmatpush1.msra.mxu0 0.0
    %120 = vmatprep.subr.mxu0 0.0
    %121 = vmatpush1.msra.mxu0 0.0
    %122 = vmatprep.subr.mxu0 0.0
    %123 = vmatpush1.msra.mxu0 0.0
    %124 = vmatprep.subr.mxu0 0.0
    %125 = vmatpush1.msra.mxu0 0.0
    %126 = vmatprep.subr.mxu0 0.0
    %127 = vmatpush1.msra.mxu0 0.0
    %128 = vmatprep.subr.mxu0 0.0
    %129 = vmatpush1.msra.mxu0 0.0
    %130 = vmatprep.subr.mxu0 0.0
    %131 = vmatpush1.msra.mxu0 0.0
    %132 = vmatprep.subr.mxu0 0.0
    %133 = vmatpush1.msra.mxu0 0.0
    %134 = vmatprep.subr.mxu0 0.0
    %135 = vmatpush1.msra.mxu0 0.0
    %136 = vmatprep.subr.mxu0 0.0
    %137 = vmatpush1.msra.mxu0 0.0
    %138 = vmatprep.subr.mxu0 0.0
    %139 = vmatpush1.msra.mxu0 0.0
    %140 = vmatprep.subr.mxu0 0.0
    %141 = vmatpush1.msra.mxu0 0.0
    %142 = vmatprep.subr.mxu0 0.0
    %143 = vmatpush1.msra.mxu0 0.0
    %144 = vmatprep.subr.mxu0 0.0
    %145 = vmatpush1.msra.mxu0 0.0
    %146 = vmatprep.mubr.f32.mxu0 %v77
    %147 = vmatmul.mubr.f32.gmra.mrb[0].mxu0 %v41
    %v148 = vpop.f32.mrb[0].mxu0
    %v149 = vadd.f32 %v68, %v148
    %v150 = vpop.f32.mrb[0].mxu0
    %151 = vmatprep.mubr.f32.mxu0 %v80
    %152 = vmatmul.mubr.f32.gmra.mrb[0].mxu0 %v43
    %v153 = vpop.f32.mrb[0].mxu0
    %v154 = vadd.f32 %v73, %v153
    %v155 = vpop.f32.mrb[0].mxu0
    %156 = vdwg.mxu0
    %v157 = vmax.f32 %v149, 0.0
    %v158 = vmax.f32 %v154, 0.0
    %v160 = vrot.slane %v157, 4
    %v162 = vmax.f32 %v157, %v160
    %v164 = vrot.slane %v158, 4
    %v166 = vmax.f32 %v158, %v164
    %v167 = vmax.f32 %v162, %v166
    %v168 = vld [vmem:[%s3] sm:$0xff]
    %v169 = vld [vmem:[%s3 + $0x8] sm:$0xff]
    %v170 = vld [vmem:[%s3 + $0x10] sm:$0xff]
    %v171 = vld [vmem:[%s3 + $0x18] sm:$0xff]
    %v172 = vld [vmem:[%s4] sm:$0xff]
    %v173 = vld [vmem:[%s4 + $0x8] sm:$0xff]
    %v174 = vld [vmem:[%s4 + $0x10] sm:$0xff]
    %v175 = vld [vmem:[%s4 + $0x18] sm:$0xff]
    %177 = vset.pattern.permute.xlu0 0
    %178 = vperm.xlu0 %177, %v172
    %v179 = vpop.permute.xlu0 %178
    %182 = vset.pattern.permute.xlu0 0
    %183 = vperm.xlu0 %182, %v173
    %v184 = vpop.permute.xlu0 %183
    %187 = vset.pattern.permute.xlu0 0
    %188 = vperm.xlu0 %187, %v174
    %v189 = vpop.permute.xlu0 %188
    %192 = vset.pattern.permute.xlu0 0
    %193 = vperm.xlu0 %192, %v175
    %v194 = vpop.permute.xlu0 %193
    %vm196 = vcmask 31744
    %v198 = vsel %vm196, %v168, 0
    %v201 = vsel %vm196, %v169, 0
    %v204 = vsel %vm196, %v170, 0
    %v207 = vsel %vm196, %v171, 0
    %vm209 = vcmask 1043456
    %v211 = vsel %vm209, %v167, 0
    %213 = vmatprep.subr.mxu0 0.0
    %214 = vmatpush1.msra.mxu0 %v211
    %215 = vmatprep.subr.mxu0 0.0
    %216 = vmatpush1.msra.mxu0 0.0
    %217 = vmatprep.subr.mxu0 0.0
    %218 = vmatpush1.msra.mxu0 0.0
    %219 = vmatprep.subr.mxu0 0.0
    %220 = vmatpush1.msra.mxu0 0.0
    %221 = vmatprep.subr.mxu0 0.0
    %222 = vmatpush1.msra.mxu0 0.0
    %223 = vmatprep.subr.mxu0 0.0
    %224 = vmatpush1.msra.mxu0 0.0
    %225 = vmatprep.subr.mxu0 0.0
    %226 = vmatpush1.msra.mxu0 0.0
    %227 = vmatprep.subr.mxu0 0.0
    %228 = vmatpush1.msra.mxu0 0.0
    %229 = vmatprep.subr.mxu0 0.0
    %230 = vmatpush1.msra.mxu0 0.0
    %231 = vmatprep.subr.mxu0 0.0
    %232 = vmatpush1.msra.mxu0 0.0
    %233 = vmatprep.subr.mxu0 0.0
    %234 = vmatpush1.msra.mxu0 0.0
    %235 = vmatprep.subr.mxu0 0.0
    %236 = vmatpush1.msra.mxu0 0.0
    %237 = vmatprep.subr.mxu0 0.0
    %238 = vmatpush1.msra.mxu0 0.0
    %239 = vmatprep.subr.mxu0 0.0
    %240 = vmatpush1.msra.mxu0 0.0
    %241 = vmatprep.subr.mxu0 0.0
    %242 = vmatpush1.msra.mxu0 0.0
    %243 = vmatprep.subr.mxu0 0.0
    %244 = vmatpush1.msra.mxu0 0.0
    %245 = vmatprep.subr.mxu0 0.0
    %246 = vmatpush1.msra.mxu0 0.0
    %247 = vmatprep.subr.mxu0 0.0
    %248 = vmatpush1.msra.mxu0 0.0
    %249 = vmatprep.subr.mxu0 0.0
    %250 = vmatpush1.msra.mxu0 0.0
    %251 = vmatprep.subr.mxu0 0.0
    %252 = vmatpush1.msra.mxu0 0.0
    %253 = vmatprep.subr.mxu0 0.0
    %254 = vmatpush1.msra.mxu0 0.0
    %255 = vmatprep.subr.mxu0 0.0
    %256 = vmatpush1.msra.mxu0 0.0
    %257 = vmatprep.subr.mxu0 0.0
    %258 = vmatpush1.msra.mxu0 0.0
    %259 = vmatprep.subr.mxu0 0.0
    %260 = vmatpush1.msra.mxu0 0.0
    %261 = vmatprep.subr.mxu0 0.0
    %262 = vmatpush1.msra.mxu0 0.0
    %263 = vmatprep.subr.mxu0 0.0
    %264 = vmatpush1.msra.mxu0 0.0
    %265 = vmatprep.subr.mxu0 0.0
    %266 = vmatpush1.msra.mxu0 0.0
    %267 = vmatprep.subr.mxu0 0.0
    %268 = vmatpush1.msra.mxu0 0.0
    %269 = vmatprep.subr.mxu0 0.0
    %270 = vmatpush1.msra.mxu0 0.0
    %271 = vmatprep.subr.mxu0 0.0
    %272 = vmatpush1.msra.mxu0 0.0
    %273 = vmatprep.subr.mxu0 0.0
    %274 = vmatpush1.msra.mxu0 0.0
    %275 = vmatprep.subr.mxu0 0.0
    %276 = vmatpush1.msra.mxu0 0.0
    %277 = vmatprep.mubr.f32.mxu0 0.0
    %278 = vmatmul.mubr.f32.gmra.mrb[0].mxu0 %v198
    %v279 = vpop.f32.mrb[0].mxu0
    %v280 = vadd.f32 %v179, %v279
    %v281 = vpop.f32.mrb[0].mxu0
    %282 = vmatprep.mubr.f32.mxu0 0.0
    %283 = vmatmul.mubr.f32.gmra.mrb[0].mxu0 %v201
    %v284 = vpop.f32.mrb[0].mxu0
    %v285 = vadd.f32 %v184, %v284
    %v286 = vpop.f32.mrb[0].mxu0
    %287 = vmatprep.mubr.f32.mxu0 0.0
    %288 = vmatmul.mubr.f32.gmra.mrb[0].mxu0 %v204
    %v289 = vpop.f32.mrb[0].mxu0
    %v290 = vadd.f32 %v189, %v289
    %v291 = vpop.f32.mrb[0].mxu0
    %292 = vmatprep.mubr.f32.mxu0 0.0
    %293 = vmatmul.mubr.f32.gmra.mrb[0].mxu0 %v207
    %v294 = vpop.f32.mrb[0].mxu0
    %v295 = vadd.f32 %v194, %v294
    %v296 = vpop.f32.mrb[0].mxu0
    %297 = vdwg.mxu0
    %vm298 = vcmp.gt.f32.partialorder %v280, 0.0
    %vm299 = vcmp.gt.f32.partialorder %v285, 0.0
    %vm300 = vcmp.gt.f32.partialorder %v290, 0.0
    %vm301 = vcmp.gt.f32.partialorder %v295, 0.0
    %v302 = vmul.f32 %v280, 0.01
    %v303 = vmul.f32 %v285, 0.01
    %v304 = vmul.f32 %v290, 0.01
    %v305 = vmul.f32 %v295, 0.01
    %v306 = vsel %vm298, %v280, %v302
    %v307 = vsel %vm299, %v285, %v303
    %v308 = vsel %vm300, %v290, %v304
    %v309 = vsel %vm301, %v295, %v305
    %v310 = vld [vmem:[%s5] sm:$0xf]
    %v311 = vld [vmem:[%s6] sm:$0xf]
    %313 = vset.pattern.permute.xlu0 0
    %314 = vperm.xlu0 %313, %v311
    %v315 = vpop.permute.xlu0 %314
    %vm317 = vcmask 261120
    %v319 = vsel %vm317, %v310, 0
    %321 = vmatprep.subr.mxu0 0.0
    %322 = vmatpush1.msra.mxu0 %v306
    %323 = vmatprep.subr.mxu0 0.0
    %324 = vmatpush1.msra.mxu0 %v307
    %325 = vmatprep.subr.mxu0 0.0
    %326 = vmatpush1.msra.mxu0 %v308
    %327 = vmatprep.subr.mxu0 0.0
    %328 = vmatpush1.msra.mxu0 %v309
    %329 = vmatprep.subr.mxu0 0.0
    %330 = vmatpush1.msra.mxu0 0.0
    %331 = vmatprep.subr.mxu0 0.0
    %332 = vmatpush1.msra.mxu0 0.0
    %333 = vmatprep.subr.mxu0 0.0
    %334 = vmatpush1.msra.mxu0 0.0
    %335 = vmatprep.subr.mxu0 0.0
    %336 = vmatpush1.msra.mxu0 0.0
    %337 = vmatprep.subr.mxu0 0.0
    %338 = vmatpush1.msra.mxu0 0.0
    %339 = vmatprep.subr.mxu0 0.0
    %340 = vmatpush1.msra.mxu0 0.0
    %341 = vmatprep.subr.mxu0 0.0
    %342 = vmatpush1.msra.mxu0 0.0
    %343 = vmatprep.subr.mxu0 0.0
    %344 = vmatpush1.msra.mxu0 0.0
    %345 = vmatprep.subr.mxu0 0.0
    %346 = vmatpush1.msra.mxu0 0.0
    %347 = vmatprep.subr.mxu0 0.0
    %348 = vmatpush1.msra.mxu0 0.0
    %349 = vmatprep.subr.mxu0 0.0
    %350 = vmatpush1.msra.mxu0 0.0
    %351 = vmatprep.subr.mxu0 0.0
    %352 = vmatpush1.msra.mxu0 0.0
    %353 = vmatprep.subr.mxu0 0.0
    %354 = vmatpush1.msra.mxu0 0.0
    %355 = vmatprep.subr.mxu0 0.0
    %356 = vmatpush1.msra.mxu0 0.0
    %357 = vmatprep.subr.mxu0 0.0
    %358 = vmatpush1.msra.mxu0 0.0
    %359 = vmatprep.subr.mxu0 0.0
    %360 = vmatpush1.msra.mxu0 0.0
    %361 = vmatprep.subr.mxu0 0.0
    %362 = vmatpush1.msra.mxu0 0.0
    %363 = vmatprep.subr.mxu0 0.0
    %364 = vmatpush1.msra.mxu0 0.0
    %365 = vmatprep.subr.mxu0 0.0
    %366 = vmatpush1.msra.mxu0 0.0
    %367 = vmatprep.subr.mxu0 0.0
    %368 = vmatpush1.msra.mxu0 0.0
    %369 = vmatprep.subr.mxu0 0.0
    %370 = vmatpush1.msra.mxu0 0.0
    %371 = vmatprep.subr.mxu0 0.0
    %372 = vmatpush1.msra.mxu0 0.0
    %373 = vmatprep.subr.mxu0 0.0
    %374 = vmatpush1.msra.mxu0 0.0
    %375 = vmatprep.subr.mxu0 0.0
    %376 = vmatpush1.msra.mxu0 0.0
    %377 = vmatprep.subr.mxu0 0.0
    %378 = vmatpush1.msra.mxu0 0.0
    %379 = vmatprep.subr.mxu0 0.0
    %380 = vmatpush1.msra.mxu0 0.0
    %381 = vmatprep.subr.mxu0 0.0
    %382 = vmatpush1.msra.mxu0 0.0
    %383 = vmatprep.subr.mxu0 0.0
    %384 = vmatpush1.msra.mxu0 0.0
    %385 = vmatprep.mubr.f32.mxu0 0.0
    %386 = vmatmul.mubr.f32.gmra.mrb[0].mxu0 %v319
    %v387 = vpop.f32.mrb[0].mxu0
    %v388 = vadd.f32 %v315, %v387
    %v389 = vpop.f32.mrb[0].mxu0
    %390 = vdwg.mxu0
    %v391 = vsel %vm209, %v388, -inf
    %v392 = vrot.slane %v391, 4
    %v393 = vmax.f32 %v391, %v392
    %v394 = vrot.slane %v393, 2
    %v395 = vmax.f32 %v393, %v394
    %v396 = vrot.slane %v395, 1
    %v397 = vmax.f32 %v395, %v396
    %v398 = vsub.f32 %v388, %v397
    %v399 = vmul.f32 %v398, 1.442695
    %v400 = vpow.pop %v399
    %v401 = vsel %vm209, %v400, 0.0
    %v402 = vrot.slane %v401, 4
    %v403 = vadd.f32 %v401, %v402
    %v404 = vrot.slane %v403, 2
    %v405 = vadd.f32 %v403, %v404
    %v406 = vrot.slane %v405, 1
    %v407 = vadd.f32 %v405, %v406
    %v408 = vrcp.pop %v407
    %v409 = vmul.f32 %v400, %v408
    %v410 = vmul.f32 %v409, %v167
    %v411 = vsel %vm209, %v410, 0.0
    %v412 = vrot.slane %v411, 4
    %v413 = vadd.f32 %v411, %v412
    %v414 = vrot.slane %v413, 2
    %v415 = vadd.f32 %v413, %v414
    %v416 = vrot.slane %v415, 1
    %v417 = vadd.f32 %v415, %v416
    %418 = vst [vmem:[#allocation5] sm:$0x1] %v417
    // Predicated region
    $region34: #{tpu_custom_call.1} parent=1 // pred_check
      _
    $region35: #{tpu_custom_call.1} parent=1 // pred_check_branch
      %420 = sbr.rel (0) target = $region37
    $region36: #{tpu_custom_call.1} parent=1 // pred_region
      %s422 = ssub.s32 16, 16
      %423 = vsyncadd [#allocation4], %s422
      %s425 = sshll.u32 [#allocation5], 4
      %s426 = int_to_ptr.vmem [resolvable:$true] %s425
      %428 = dma.vmem_to_hbm [thread:$0]  %s426, 16, %s7, [#allocation4]
    $region37: #{tpu_custom_call.1} parent=1 // pred_fallthru
      _
    // Predicated region
    $region38: #{tpu_custom_call.1} parent=1 // pred_check
      _
    $region39: #{tpu_custom_call.1} parent=1 // pred_check_branch
      %430 = sbr.rel (0) target = $region41
    $region40: #{tpu_custom_call.1} parent=1 // pred_region
      %431 = dma.done [#allocation4], 16
    $region41: #{tpu_custom_call.1} parent=1 // pred_fallthru
      _
    %432 = vsyncpa [#allocation3], 1
    %433 = vsyncpa [#allocation4], 1

</llo_original>
